<compile_context>
chip_gen: v7x
topology: tpu7x:2x2x1
jax: 0.10.0
libtpu: 0.0.40
codegen_flags: <defaults>
</compile_context>

<pallas_src>
import functools
import numpy as np
import jax
import jax.numpy as jnp
from jax import lax
from jax.experimental import pallas as pl
from jax.experimental.pallas import tpu as pltpu


# ---------------------------------------------------------------------------
# Sinusoid position table (identical math to the PyTorch helper).
# ---------------------------------------------------------------------------
def get_sinusoid_encoding_table(n_position, d_hid, padding_idx=None):
    def cal_angle(position, hid_idx):
        return position / np.power(10000, 2 * (hid_idx // 2) / d_hid)

    table = np.array(
        [[cal_angle(pos, j) for j in range(d_hid)] for pos in range(n_position)],
        dtype=np.float64,
    )
    table[:, 0::2] = np.sin(table[:, 0::2])
    table[:, 1::2] = np.cos(table[:, 1::2])
    if padding_idx is not None:
        table[padding_idx] = 0.0
    return jnp.asarray(table, dtype=jnp.float32)


# ---------------------------------------------------------------------------
# Embed stage: 1x1 conv (per-token matmul) + positional embedding add.
# Rows = batch*seq collapsed into one axis, tiled; projection weights are
# resident (constant index_map).  Output dtype is selectable (bf16 for k_in).
# ---------------------------------------------------------------------------
def _proj_embed_kernel(x_ref, pos_ref, w_ref, b_ref, o_ref):
    o_ref[...] = (jnp.dot(x_ref[...], w_ref[...],
                          preferred_element_type=jnp.float32)
                  + b_ref[...] + pos_ref[...]).astype(o_ref.dtype)


def project_and_add_pos(x_rows, pos_rows, w, b, out_dtype, row_tile=256):
    rows, k_dim = x_rows.shape
    D = w.shape[1]
    if rows <= row_tile:
        tile = max(8, ((rows + 7) // 8) * 8)
    else:
        tile = row_tile
    rows_p = ((rows + tile - 1) // tile) * tile
    if rows_p != rows:
        x_rows = jnp.pad(x_rows, ((0, rows_p - rows), (0, 0)))
        pos_rows = jnp.pad(pos_rows, ((0, rows_p - rows), (0, 0)))
    out = pl.pallas_call(
        _proj_embed_kernel,
        out_shape=jax.ShapeDtypeStruct((rows_p, D), out_dtype),
        grid=(rows_p // tile,),
        in_specs=[
            pl.BlockSpec((tile, k_dim), lambda r: (r, 0)),
            pl.BlockSpec((tile, D), lambda r: (r, 0)),
            pl.BlockSpec((k_dim, D), lambda r: (0, 0)),   # resident weight
            pl.BlockSpec((1, D), lambda r: (0, 0)),       # resident bias
        ],
        out_specs=pl.BlockSpec((tile, D), lambda r: (r, 0)),
        compiler_params=pltpu.CompilerParams(dimension_semantics=("parallel",)),
    )(x_rows, pos_rows, w, b)
    return out[:rows]


# ---------------------------------------------------------------------------
# Layer-stack kernel: grid = (batch, q_tile, layer), layer innermost.
# The running decoder activation lives in the resident output block across
# the layer axis.  Each layer: MHA (head-batched einsums, in-kernel causal
# select, f32 softmax) -> fc folded per head (batched matmul + head sum) ->
# residual -> LN -> pad mask -> FFN (relu) -> residual -> LN -> pad mask.
# ---------------------------------------------------------------------------
def _layers_kernel(n_head, d_k, d_v, eps, q_tile, causal, return_attn,
                   weights_resident,
                   dec0_ref, kin_ref, pad_ref,
                   wq_ref, bq_ref, wk_ref, bk_ref, wv_ref, bv_ref,
                   fcw_ref, fcb_ref, g1_ref, be1_ref,
                   w1_ref, b1_ref, w2_ref, b2_ref, g2_ref, be2_ref,
                   out_ref, attn_ref=None):
    layer = pl.program_id(2)
    qt = pl.program_id(1)
    # Resident weight stack -> index with the layer id; streamed -> block 0.
    li = layer if weights_resident else 0

    # Layer 0: seed the resident activation block from the embedded input.
    @pl.when(layer == 0)
    def _():
        out_ref[0] = dec0_ref[0]

    x = out_ref[0]                 # (TQ, D) f32 running activation (resident)
    pad = pad_ref[0]               # (TQ, 1) f32 {0,1}

    bf16 = jnp.bfloat16
    x_bf = x.astype(bf16)
    kin_bf = kin_ref[0]            # (Lk, D) bf16 (stored bf16 by the embed stage)

    # Head-batched Q/K/V projections.  Weights are pre-split per head in the
    # wrapper ((H, D, dk)); the lhs is broadcast over heads so this is a clean
    # batched dot_general (no lane slices / stacks).  1/sqrt(d_k) is folded
    # into wq/bq.
    xh = jnp.broadcast_to(x_bf[None], (n_head,) + x_bf.shape)        # (H,TQ,D)
    kh_in = jnp.broadcast_to(kin_bf[None], (n_head,) + kin_bf.shape)  # (H,Lk,D)

    qh = jnp.einsum('hqd,hdk->hqk', xh, wq_ref[li],
                    preferred_element_type=jnp.float32) + bq_ref[li]
    kh = jnp.einsum('hqd,hdk->hqk', kh_in, wk_ref[li],
                    preferred_element_type=jnp.float32) + bk_ref[li]
    vh = jnp.einsum('hqd,hdk->hqk', kh_in, wv_ref[li],
                    preferred_element_type=jnp.float32) + bv_ref[li]

    # Scores for all heads in one batched matmul: (H, TQ, Lk), f32 accum.
    s = jnp.einsum('hqd,hkd->hqk', qh.astype(bf16), kh.astype(bf16),
                   preferred_element_type=jnp.float32)

    if causal:
        tq_len, lk = s.shape[1], s.shape[2]
        row = qt * q_tile + lax.broadcasted_iota(jnp.int32, (tq_len, lk), 0)
        col = lax.broadcasted_iota(jnp.int32, (tq_len, lk), 1)
        # Select on s directly (no separate bias array + add per head).
        s = jnp.where((col > row)[None, :, :], jnp.float32(-1e9), s)

    # Softmax in f32.  Approx reciprocal (EUP) only when the attention maps
    # are not returned, so returned maps sum to 1 like the reference.
    m = jnp.max(s, axis=-1, keepdims=True)
    e = jnp.exp(s - m)
    denom = jnp.sum(e, axis=-1, keepdims=True)
    a = e * pl.reciprocal(denom, approx=not return_attn)     # (H, TQ, Lk)

    if return_attn:
        attn_ref[0, :, 0, :, :] = a.astype(attn_ref.dtype)   # bf16 writeback

    # PV for all heads: (H, TQ, dv), f32 accumulation.
    oh = jnp.einsum('hqk,hkd->hqd', a.astype(bf16), vh.astype(bf16),
                    preferred_element_type=jnp.float32)

    # fc folded per head: sum_h oh[h] @ fcw[h]  ==  concat(heads) @ fc_weight.
    fc_parts = jnp.einsum('hqd,hdm->hqm', oh.astype(bf16), fcw_ref[li],
                          preferred_element_type=jnp.float32)
    o = jnp.sum(fc_parts, axis=0) + fcb_ref[li] + x
    mu = jnp.mean(o, axis=-1, keepdims=True)
    var = jnp.mean((o - mu) ** 2, axis=-1, keepdims=True)
    o = (o - mu) * lax.rsqrt(var + eps) * g1_ref[li] + be1_ref[li]
    o = o * pad

    # Position-wise FFN (1x1 convs == matmuls) + residual + layer_norm.
    resid = o
    h1 = jnp.maximum(
        jnp.dot(o.astype(bf16), w1_ref[li],
                preferred_element_type=jnp.float32) + b1_ref[li], 0.0)
    h2 = jnp.dot(h1.astype(bf16), w2_ref[li],
                 preferred_element_type=jnp.float32) + b2_ref[li]
    o = h2 + resid
    mu = jnp.mean(o, axis=-1, keepdims=True)
    var = jnp.mean((o - mu) ** 2, axis=-1, keepdims=True)
    o = (o - mu) * lax.rsqrt(var + eps) * g2_ref[li] + be2_ref[li]
    o = o * pad

    out_ref[0] = o


def _pick_query_tile(L):
    # Cap at 128: keeps the (H,TQ,Lk) f32 softmax intermediates and the
    # double-buffered attention output block inside v7x's 64 MiB VMEM at
    # realistic Lk, with negligible MXU loss.  Always a multiple of 8.
    cap = 128
    if L <= cap:
        return max(8, ((L + 7) // 8) * 8)
    return cap


def cross_decoder_layers(dec0, k_in, pad3, weights, n_head, d_k, d_v,
                         use_full_attention, return_attn):
    bsz, L, D = dec0.shape
    Lk = k_in.shape[1]
    NL = weights[0].shape[0]

    if not use_full_attention:
        # The PyTorch subsequent mask is (L, L); it only broadcasts when L==Lk.
        assert L == Lk, "causal (subsequent) mask requires L == Lk"

    TQ = _pick_query_tile(L)
    Lp = ((L + TQ - 1) // TQ) * TQ
    if Lp != L:
        dec0 = jnp.pad(dec0, ((0, 0), (0, Lp - L), (0, 0)))
        pad3 = jnp.pad(pad3, ((0, 0), (0, Lp - L), (0, 0)))
    nqt = Lp // TQ   # NOTE(v7x): keep bsz*nqt >= 2 so both TensorCores are fed.

    # Keep the full stacked weights VMEM-resident (fetched once) when small;
    # otherwise stream one layer's weight blocks per grid step.
    weight_bytes = sum(int(np.prod(w.shape)) * w.dtype.itemsize for w in weights)
    weights_resident = weight_bytes <= (8 * 1024 * 1024)

    kernel = functools.partial(_layers_kernel, n_head, d_k, d_v, 1e-5, TQ,
                               not use_full_attention, return_attn,
                               weights_resident)

    def wspec(arr):
        if weights_resident:
            zeros = (0,) * arr.ndim
            return pl.BlockSpec(tuple(arr.shape),
                                lambda b, qt, l, _z=zeros: _z)
        zeros = (0,) * (arr.ndim - 1)
        return pl.BlockSpec((1,) + tuple(arr.shape[1:]),
                            lambda b, qt, l, _z=zeros: (l,) + _z)

    in_specs = [
        pl.BlockSpec((1, TQ, D), lambda b, qt, l: (b, qt, 0)),
        pl.BlockSpec((1, Lk, D), lambda b, qt, l: (b, 0, 0)),
        pl.BlockSpec((1, TQ, 1), lambda b, qt, l: (b, qt, 0)),
    ] + [wspec(w) for w in weights]

    out_shape = [jax.ShapeDtypeStruct((bsz, Lp, D), jnp.float32)]
    out_specs = [pl.BlockSpec((1, TQ, D), lambda b, qt, l: (b, qt, 0))]
    if return_attn:
        # Final layout directly: (NL, H, B, Lp, Lk) so the PyTorch (H*B, L, Lk)
        # view is a pure reshape; bf16 halves the writeback bandwidth.
        out_shape.append(
            jax.ShapeDtypeStruct((NL, n_head, bsz, Lp, Lk), jnp.bfloat16))
        out_specs.append(
            pl.BlockSpec((1, n_head, 1, TQ, Lk),
                         lambda b, qt, l: (l, 0, b, qt, 0)))

    results = pl.pallas_call(
        kernel,
        out_shape=tuple(out_shape),
        grid=(bsz, nqt, NL),
        in_specs=in_specs,
        out_specs=tuple(out_specs),
        compiler_params=pltpu.CompilerParams(
            dimension_semantics=("parallel", "parallel", "arbitrary"),
            # Raise the scoped VMEM limit (v5e default ~16 MiB); stays below
            # v7x's 64 MiB physical VMEM.
            vmem_limit_bytes=48 * 1024 * 1024),
    )(dec0, k_in, pad3, *weights)

    dec_out = results[0][:, :L]
    if return_attn:
        return dec_out, results[1][:, :, :, :L, :]
    return dec_out, None


# ---------------------------------------------------------------------------
# Full CrossDecoder forward.
# ---------------------------------------------------------------------------
def cross_decoder_forward(params, decoder_input, k_input, padding_mask,
                          decoder_pos_vec, k_pos_vec,
                          n_head, d_k, d_v, use_full_attention=False,
                          return_attn=False):
    pad = jnp.squeeze(padding_mask, axis=1).astype(jnp.float32)   # (bs, L)
    dpos = jnp.squeeze(decoder_pos_vec, axis=1)                   # (bs, L) int
    kpos = jnp.squeeze(k_pos_vec, axis=1)                         # (bs, Lk) int

    bsz, d_feats, L = decoder_input.shape
    d_key, Lk = k_input.shape[1], k_input.shape[2]

    # NCL -> (rows, C) glue.
    x_rows = jnp.transpose(decoder_input, (0, 2, 1)).reshape(bsz * L, d_feats)
    x_rows = x_rows.astype(jnp.float32)
    kx_rows = jnp.transpose(k_input, (0, 2, 1)).reshape(bsz * Lk, d_key)
    kx_rows = kx_rows.astype(jnp.float32)

    # TODO(synk): the frozen sinusoid embedding lookup (gather) stays in JAX glue.
    pos_emb = jnp.take(params["pos_table"], dpos.reshape(-1), axis=0)
    k_pos_emb = jnp.take(params["pos_table"], kpos.reshape(-1), axis=0)

    ws = jnp.transpose(params["start_conv_w"], (1, 0)).astype(jnp.float32)
    bs_ = params["start_conv_b"].reshape(1, -1).astype(jnp.float32)
    wkc = jnp.transpose(params["k_conv_w"], (1, 0)).astype(jnp.float32)
    bkc = params["k_conv_b"].reshape(1, -1).astype(jnp.float32)
    D = ws.shape[1]

    dec0 = project_and_add_pos(x_rows, pos_emb, ws, bs_,
                               jnp.float32).reshape(bsz, L, D)
    # k_in is only ever consumed as a bf16 MXU operand -> store it bf16.
    k_in = project_and_add_pos(kx_rows, k_pos_emb, wkc, bkc,
                               jnp.bfloat16).reshape(bsz, Lk, D)

    pad3 = pad[:, :, None]                                        # (bs, L, 1)

    layers = params["layers"]
    NL = len(layers)
    bf16 = jnp.bfloat16
    inv_temp = 1.0 / float(np.power(d_k, 0.5))

    def stk(i, dtype=jnp.float32):
        return jnp.stack([lp[i] for lp in layers], axis=0).astype(dtype)

    def heads(w, dh):   # (NL, D, H*dh) -> (NL, H, D, dh)
        return jnp.transpose(w.reshape(NL, D, n_head, dh), (0, 2, 1, 3))

    weights = (
        (heads(stk(0), d_k) * inv_temp).astype(bf16),             # wq (scaled)
        stk(1).reshape(NL, n_head, 1, d_k) * inv_temp,            # bq (scaled)
        heads(stk(2), d_k).astype(bf16),                          # wk
        stk(3).reshape(NL, n_head, 1, d_k),                       # bk
        heads(stk(4), d_v).astype(bf16),                          # wv
        stk(5).reshape(NL, n_head, 1, d_v),                       # bv
        stk(6).reshape(NL, n_head, d_v, D).astype(bf16),          # fc w per head
        stk(7),                                                   # fc bias
        stk(8), stk(9),                                           # ln1 g / b
        stk(10, bf16), stk(11),                                   # ffn w1 / b1
        stk(12, bf16), stk(13),                                   # ffn w2 / b2
        stk(14), stk(15),                                         # ln2 g / b
    )

    dec_out, attn_all = cross_decoder_layers(
        dec0, k_in, pad3, weights, n_head, d_k, d_v,
        use_full_attention, return_attn)

    dec_self_attn_list = []
    if return_attn:
        # attn_all is (NL, H, B, L, Lk) head-major -> PyTorch's (H*B, L, Lk)
        # per-layer view is a pure reshape (no transpose).  Kept in bf16.
        for l in range(NL):
            dec_self_attn_list.append(attn_all[l].reshape(n_head * bsz, L, Lk))
    return dec_out, dec_self_attn_list


# ---------------------------------------------------------------------------
# Pure-JAX reference (faithful f32 translation of the PyTorch module).
# ---------------------------------------------------------------------------
def cross_decoder_reference(params, decoder_input, k_input, padding_mask,
                            decoder_pos_vec, k_pos_vec, n_head, d_k, d_v,
                            use_full_attention=False):
    pad = jnp.squeeze(padding_mask, 1).astype(jnp.float32)
    dpos = jnp.squeeze(decoder_pos_vec, 1)
    kpos = jnp.squeeze(k_pos_vec, 1)
    x = jnp.transpose(decoder_input, (0, 2, 1)).astype(jnp.float32)
    kx = jnp.transpose(k_input, (0, 2, 1)).astype(jnp.float32)
    dec = (x @ params["start_conv_w"].T + params["start_conv_b"]
           + jnp.take(params["pos_table"], dpos, axis=0))
    kin = (kx @ params["k_conv_w"].T + params["k_conv_b"]
           + jnp.take(params["pos_table"], kpos, axis=0))
    bsz, L, _ = dec.shape
    Lk = kin.shape[1]
    eps = 1e-5
    attn_list = []
    for (wq, bq, wk, bk, wv, bv, fcw, fcb, g1, be1,
         w1, b1, w2, b2, g2, be2) in params["layers"]:
        q = dec @ wq + bq
        k = kin @ wk + bk
        v = kin @ wv + bv
        qh = q.reshape(bsz, L, n_head, d_k).transpose(2, 0, 1, 3)
        kh = k.reshape(bsz, Lk, n_head, d_k).transpose(2, 0, 1, 3)
        vh = v.reshape(bsz, Lk, n_head, d_v).transpose(2, 0, 1, 3)
        s = jnp.einsum('hbqd,hbkd->hbqk', qh, kh) / np.power(d_k, 0.5)
        if not use_full_attention:
            mask = jnp.triu(jnp.ones((L, Lk), bool), k=1)
            s = jnp.where(mask[None, None], -jnp.inf, s)
        a = jax.nn.softmax(s, axis=-1)
        attn_list.append(a.reshape(n_head * bsz, L, Lk))
        o = jnp.einsum('hbqk,hbkd->hbqd', a, vh)
        o = o.transpose(1, 2, 0, 3).reshape(bsz, L, n_head * d_v)
        o = o @ fcw + fcb + dec
        mu = o.mean(-1, keepdims=True)
        var = ((o - mu) ** 2).mean(-1, keepdims=True)
        o = (o - mu) / jnp.sqrt(var + eps) * g1 + be1
        o = o * pad[:, :, None]
        r = o
        h1 = jax.nn.relu(o @ w1 + b1)
        o = h1 @ w2 + b2 + r
        mu = o.mean(-1, keepdims=True)
        var = ((o - mu) ** 2).mean(-1, keepdims=True)
        o = (o - mu) / jnp.sqrt(var + eps) * g2 + be2
        o = o * pad[:, :, None]
        dec = o
    return dec, attn_list


# ---------------------------------------------------------------------------
# Deterministic parameter construction + demo run.
# ---------------------------------------------------------------------------
if __name__ == "__main__":
    bs, L = 2, 8
    d_feats, d_input_key = 4, 6
    d_model = 32
    n_layers = 2
    n_head = 2
    d_k = d_v = 16
    max_timesteps = 16

    base_key = jax.random.PRNGKey(0)
    _counter = [0]

    def nrm(shape, std):
        _counter[0] += 1
        k = jax.random.fold_in(base_key, _counter[0])
        return (jax.random.normal(k, shape, jnp.float32) * std).astype(jnp.float32)

    params = {
        "start_conv_w": nrm((d_model, d_feats), 0.1),     # Conv1d weight (out, in)
        "start_conv_b": nrm((d_model,), 0.02),
        "k_conv_w": nrm((d_model, d_input_key), 0.1),
        "k_conv_b": nrm((d_model,), 0.02),
        "pos_table": get_sinusoid_encoding_table(max_timesteps + 1, d_model,
                                                 padding_idx=0),
        "layers": [],
    }

    for _ in range(n_layers):
        wq = nrm((d_model, n_head * d_k), float(np.sqrt(2.0 / (d_model + d_k))))
        bq = nrm((1, n_head * d_k), 0.02)
        wk = nrm((d_model, n_head * d_k), float(np.sqrt(2.0 / (d_model + d_k))))
        bk = nrm((1, n_head * d_k), 0.02)
        wv = nrm((d_model, n_head * d_v), float(np.sqrt(2.0 / (d_model + d_v))))
        bv = nrm((1, n_head * d_v), 0.02)
        fcw = nrm((n_head * d_v, d_model),
                  float(np.sqrt(2.0 / (n_head * d_v + d_model))))
        fcb = nrm((1, d_model), 0.02)
        g1 = jnp.ones((1, d_model), jnp.float32)
        be1 = jnp.zeros((1, d_model), jnp.float32)
        w1 = nrm((d_model, d_model), 0.1)     # pos_ffn.w_1 (in, out) layout
        b1 = nrm((1, d_model), 0.02)
        w2 = nrm((d_model, d_model), 0.1)     # pos_ffn.w_2 (in, out) layout
        b2 = nrm((1, d_model), 0.02)
        g2 = jnp.ones((1, d_model), jnp.float32)
        be2 = jnp.zeros((1, d_model), jnp.float32)
        params["layers"].append(
            (wq, bq, wk, bk, wv, bv, fcw, fcb, g1, be1,
             w1, b1, w2, b2, g2, be2))

    # Inputs (Conv1d layout: NCL)
    decoder_input = jax.random.normal(jax.random.fold_in(base_key, 1000),
                                      (bs, d_feats, L), jnp.float32)
    k_input = jax.random.normal(jax.random.fold_in(base_key, 1001),
                                (bs, d_input_key, L), jnp.float32)

    padding_mask = jnp.ones((bs, 1, L), jnp.float32)
    padding_mask = padding_mask.at[1, 0, L - 2:].set(0.0)

    pos = jnp.arange(1, L + 1, dtype=jnp.int32)
    decoder_pos_vec = jnp.tile(pos[None, None, :], (bs, 1, 1))
    decoder_pos_vec = decoder_pos_vec.at[1, 0, L - 2:].set(0)   # padding_idx=0
    k_pos_vec = jnp.tile(pos[None, None, :], (bs, 1, 1))

    # Serving path: no attention-map writeback.
    dec_out_fast, attn_fast = cross_decoder_forward(
        params, decoder_input, k_input, padding_mask,
        decoder_pos_vec, k_pos_vec, n_head, d_k, d_v,
        use_full_attention=False, return_attn=False)
    jax.block_until_ready(dec_out_fast)
    assert attn_fast == []

    # Full path: attention maps returned (PyTorch-compatible layout).
    dec_out, attn_list = cross_decoder_forward(
        params, decoder_input, k_input, padding_mask,
        decoder_pos_vec, k_pos_vec, n_head, d_k, d_v,
        use_full_attention=False, return_attn=True)
    jax.block_until_ready(dec_out)
    for a in attn_list:
        jax.block_until_ready(a)

    assert dec_out.shape == (bs, L, d_model)
    assert len(attn_list) == n_layers
    assert attn_list[0].shape == (n_head * bs, L, L)
    assert bool(jnp.all(jnp.isfinite(dec_out)))
    assert bool(jnp.all(jnp.isfinite(attn_list[0].astype(jnp.float32))))

    # Correctness vs. a pure-JAX f32 reference (bf16 MXU inputs -> loose tol).
    ref_dec, ref_attn = cross_decoder_reference(
        params, decoder_input, k_input, padding_mask,
        decoder_pos_vec, k_pos_vec, n_head, d_k, d_v,
        use_full_attention=False)
    jax.block_until_ready(ref_dec)

    assert float(jnp.max(jnp.abs(dec_out - ref_dec))) < 5e-2
    assert float(jnp.max(jnp.abs(dec_out_fast - ref_dec))) < 5e-2
    for a_k, a_r in zip(attn_list, ref_attn):
        assert float(jnp.max(jnp.abs(a_k.astype(jnp.float32) - a_r))) < 5e-2

    print("KERNEL_OK")
</pallas_src>

<mosaic_0001>
module attributes {stable_mosaic.version = 11 : i64} {
  func.func @_proj_embed_kernel(%arg0: i32, %arg1: memref<16x4xf32, #tpu.memory_space<vmem>>, %arg2: memref<16x32xf32, #tpu.memory_space<vmem>>, %arg3: memref<4x32xf32, #tpu.memory_space<vmem>>, %arg4: memref<1x32xf32, #tpu.memory_space<vmem>>, %arg5: memref<16x32xf32, #tpu.memory_space<vmem>>) attributes {dimension_semantics = [#tpu.dimension_semantics<parallel>], iteration_bounds = array<i64: 1>, scalar_prefetch = 0 : i64, scratch_operands = 0 : i64, tpu.core_type = #tpu.core_type<tc>, window_params = [{transform_indices = @transform_0, window_bounds = array<i64: 16, 4>}, {transform_indices = @transform_1, window_bounds = array<i64: 16, 32>}, {pipeline_mode = #tpu.pipeline_mode<synchronous>, transform_indices = @transform_2, window_bounds = array<i64: 4, 32>}, {pipeline_mode = #tpu.pipeline_mode<synchronous>, transform_indices = @transform_3, window_bounds = array<i64: 1, 32>}, {transform_indices = @transform_4, window_bounds = array<i64: 16, 32>}]} {
    %c0 = arith.constant 0 : index
    %c0_0 = arith.constant 0 : index
    %0 = vector.load %arg1[%c0, %c0_0] : memref<16x4xf32, #tpu.memory_space<vmem>>, vector<16x4xf32>
    %c0_1 = arith.constant 0 : index
    %c0_2 = arith.constant 0 : index
    %1 = vector.load %arg3[%c0_1, %c0_2] : memref<4x32xf32, #tpu.memory_space<vmem>>, vector<4x32xf32>
    %cst = arith.constant dense<0.000000e+00> : vector<16x32xf32>
    %2 = tpu.matmul %0, %1, %cst {dimension_numbers = #tpu.dot_dimension_numbers<[1], [0], [0], [1], [0, 0, 1, 1], [], []>} : vector<16x4xf32>, vector<4x32xf32>, vector<16x32xf32> -> vector<16x32xf32>
    %c0_3 = arith.constant 0 : index
    %c0_4 = arith.constant 0 : index
    %3 = vector.load %arg4[%c0_3, %c0_4] : memref<1x32xf32, #tpu.memory_space<vmem>>, vector<1x32xf32>
    %4 = vector.broadcast %3 : vector<1x32xf32> to vector<16x32xf32>
    %5 = arith.addf %2, %4 : vector<16x32xf32>
    %c0_5 = arith.constant 0 : index
    %c0_6 = arith.constant 0 : index
    %6 = vector.load %arg2[%c0_5, %c0_6] : memref<16x32xf32, #tpu.memory_space<vmem>>, vector<16x32xf32>
    %7 = arith.addf %5, %6 : vector<16x32xf32>
    %c0_7 = arith.constant 0 : index
    %c0_8 = arith.constant 0 : index
    %8 = vector.load %arg5[%c0_7, %c0_8] : memref<16x32xf32, #tpu.memory_space<vmem>>, vector<16x32xf32>
    tpu.vector_store %arg5[%c0_7, %c0_8], %7 {strides = array<i32>} : memref<16x32xf32, #tpu.memory_space<vmem>>, vector<16x32xf32>,
    return
  }
  func.func @transform_0(%arg0: i32) -> (i32, i32) {
    %c0_i32 = arith.constant 0 : i32
    %c0_i32_0 = arith.constant 0 : i32
    return %arg0, %c0_i32 : i32, i32
  }
  func.func @transform_1(%arg0: i32) -> (i32, i32) {
    %c0_i32 = arith.constant 0 : i32
    %c0_i32_0 = arith.constant 0 : i32
    return %arg0, %c0_i32 : i32, i32
  }
  func.func @transform_2(%arg0: i32) -> (i32, i32) {
    %c0_i32 = arith.constant 0 : i32
    %c0_i32_0 = arith.constant 0 : i32
    %c0_i32_1 = arith.constant 0 : i32
    return %c0_i32, %c0_i32_0 : i32, i32
  }
  func.func @transform_3(%arg0: i32) -> (i32, i32) {
    %c0_i32 = arith.constant 0 : i32
    %c0_i32_0 = arith.constant 0 : i32
    %c0_i32_1 = arith.constant 0 : i32
    return %c0_i32, %c0_i32_0 : i32, i32
  }
  func.func @transform_4(%arg0: i32) -> (i32, i32) {
    %c0_i32 = arith.constant 0 : i32
    %c0_i32_0 = arith.constant 0 : i32
    return %arg0, %c0_i32 : i32, i32
  }
}

</mosaic_0001>

<llo_original>
// kernel: tpu_custom_call.1
$region0: #{tpu_custom_call.1}
  #allocation0 [shape = 'u32[]', space=smem, size = 0x4, offset = 0x4, fixed_abs, tag = 'smem constant byte address 0x4 - core index']
  #allocation1 [shape = 'u32[144,128]{1,0:T(1,128)}', space=vmem, size = 0x12000, scoped, tag = 'internal scratch']
  %s0 = inlined_call_operand.vmem [shape: f32[16,4], index: 0, kind: input, shape index: {}]
  %s1 = inlined_call_operand.vmem [shape: f32[16,32], index: 1, kind: input, shape index: {}]
  %s2 = inlined_call_operand.vmem [shape: f32[4,32], index: 2, kind: input, shape index: {}]
  %s3 = inlined_call_operand.vmem [shape: f32[1,32], index: 3, kind: input, shape index: {}]
  %s4 = inlined_call_operand.hbm [shape: f32[16,32], index: 4, kind: output, shape index: {}]
  %s5 = sld [smem:[#allocation0]]
  $region26: #{tpu_custom_call.1} parent=0
    _
  %s7 = ssub.s32 1, %s5
  %s8 = scalar_select 0, %s7, %s5
  $region1: #{tpu_custom_call.1} parent=0
    #allocation2 [shape = 'u8[8192]{0}', space=vmem, size = 0x2000, scoped, tag = 'output window, operand 0, single buffered']
    #allocation3 [shape = 's32[1]{0}', space=sflag, size = 0x4, scoped, tag = 'scoped memory for tpu_custom_call.1']
    %9 = vsyncpa [#allocation3], 0
    // Predicated region
    $region2: #{tpu_custom_call.1} parent=1 // pred_check
      _
    $region3: #{tpu_custom_call.1} parent=1 // pred_check_branch
      %11 = sbr.rel (0) target = $region5
    $region4: #{tpu_custom_call.1} parent=1 // pred_region
      _
    $region5: #{tpu_custom_call.1} parent=1 // pred_fallthru
      _
    // Predicated region
    $region6: #{tpu_custom_call.1} parent=1 // pred_check
      _
    $region7: #{tpu_custom_call.1} parent=1 // pred_check_branch
      %13 = sbr.rel (0) target = $region9
    $region8: #{tpu_custom_call.1} parent=1 // pred_region
      _
    $region9: #{tpu_custom_call.1} parent=1 // pred_fallthru
      _
    // Predicated region
    $region10: #{tpu_custom_call.1} parent=1 // pred_check
      _
    $region11: #{tpu_custom_call.1} parent=1 // pred_check_branch
      %15 = sbr.rel (0) target = $region13
    $region12: #{tpu_custom_call.1} parent=1 // pred_region
      _
    $region13: #{tpu_custom_call.1} parent=1 // pred_fallthru
      _
    // Predicated region
    $region14: #{tpu_custom_call.1} parent=1 // pred_check
      _
    $region15: #{tpu_custom_call.1} parent=1 // pred_check_branch
      %17 = sbr.rel (0) target = $region17
    $region16: #{tpu_custom_call.1} parent=1 // pred_region
      _
    $region17: #{tpu_custom_call.1} parent=1 // pred_fallthru
      _
    %v18 = vld [vmem:[%s0] sm:$0xff]
    %v19 = vld [vmem:[%s0 + $0x8] sm:$0xff]
    %v20 = vld [vmem:[%s2] sm:$0xf]
    %v21 = vld [vmem:[%s3] sm:$0x1]
    %v23 = vlaneseq
    %v24 = vshrl.u32 %v23, 7
    %v25 = vsub.s32 0, %v24
    %v26 = vrot.slane %v21, %v25
    %vm28 = vcmask 31744
    %v30 = vsel %vm28, %v18, 0
    %v33 = vsel %vm28, %v19, 0
    %vm35 = vcmask 1043456
    %v37 = vsel %vm35, %v20, 0
    %39 = vmatprep.subr.mxu0 0.0
    %40 = vmatpush1.msra.mxu0 %v37
    %41 = vmatprep.subr.mxu0 0.0
    %42 = vmatpush1.msra.mxu0 0.0
    %43 = vmatprep.subr.mxu0 0.0
    %44 = vmatpush1.msra.mxu0 0.0
    %45 = vmatprep.subr.mxu0 0.0
    %46 = vmatpush1.msra.mxu0 0.0
    %47 = vmatprep.subr.mxu0 0.0
    %48 = vmatpush1.msra.mxu0 0.0
    %49 = vmatprep.subr.mxu0 0.0
    %50 = vmatpush1.msra.mxu0 0.0
    %51 = vmatprep.subr.mxu0 0.0
    %52 = vmatpush1.msra.mxu0 0.0
    %53 = vmatprep.subr.mxu0 0.0
    %54 = vmatpush1.msra.mxu0 0.0
    %55 = vmatprep.subr.mxu0 0.0
    %56 = vmatpush1.msra.mxu0 0.0
    %57 = vmatprep.subr.mxu0 0.0
    %58 = vmatpush1.msra.mxu0 0.0
    %59 = vmatprep.subr.mxu0 0.0
    %60 = vmatpush1.msra.mxu0 0.0
    %61 = vmatprep.subr.mxu0 0.0
    %62 = vmatpush1.msra.mxu0 0.0
    %63 = vmatprep.subr.mxu0 0.0
    %64 = vmatpush1.msra.mxu0 0.0
    %65 = vmatprep.subr.mxu0 0.0
    %66 = vmatpush1.msra.mxu0 0.0
    %67 = vmatprep.subr.mxu0 0.0
    %68 = vmatpush1.msra.mxu0 0.0
    %69 = vmatprep.subr.mxu0 0.0
    %70 = vmatpush1.msra.mxu0 0.0
    %71 = vmatprep.subr.mxu0 0.0
    %72 = vmatpush1.msra.mxu0 0.0
    %73 = vmatprep.subr.mxu0 0.0
    %74 = vmatpush1.msra.mxu0 0.0
    %75 = vmatprep.subr.mxu0 0.0
    %76 = vmatpush1.msra.mxu0 0.0
    %77 = vmatprep.subr.mxu0 0.0
    %78 = vmatpush1.msra.mxu0 0.0
    %79 = vmatprep.subr.mxu0 0.0
    %80 = vmatpush1.msra.mxu0 0.0
    %81 = vmatprep.subr.mxu0 0.0
    %82 = vmatpush1.msra.mxu0 0.0
    %83 = vmatprep.subr.mxu0 0.0
    %84 = vmatpush1.msra.mxu0 0.0
    %85 = vmatprep.subr.mxu0 0.0
    %86 = vmatpush1.msra.mxu0 0.0
    %87 = vmatprep.subr.mxu0 0.0
    %88 = vmatpush1.msra.mxu0 0.0
    %89 = vmatprep.subr.mxu0 0.0
    %90 = vmatpush1.msra.mxu0 0.0
    %91 = vmatprep.subr.mxu0 0.0
    %92 = vmatpush1.msra.mxu0 0.0
    %93 = vmatprep.subr.mxu0 0.0
    %94 = vmatpush1.msra.mxu0 0.0
    %95 = vmatprep.subr.mxu0 0.0
    %96 = vmatpush1.msra.mxu0 0.0
    %97 = vmatprep.subr.mxu0 0.0
    %98 = vmatpush1.msra.mxu0 0.0
    %99 = vmatprep.subr.mxu0 0.0
    %100 = vmatpush1.msra.mxu0 0.0
    %101 = vmatprep.subr.mxu0 0.0
    %102 = vmatpush1.msra.mxu0 0.0
    %103 = vmatprep.mubr.f32.mxu0 0.0
    %104 = vmatmul.mubr.f32.gmra.mrb[0].mxu0 %v30
    %v105 = vpop.f32.mrb[0].mxu0
    %v106 = vadd.f32 %v26, %v105
    %v107 = vpop.f32.mrb[0].mxu0
    %108 = vmatprep.mubr.f32.mxu0 0.0
    %109 = vmatmul.mubr.f32.gmra.mrb[0].mxu0 %v33
    %v110 = vpop.f32.mrb[0].mxu0
    %v111 = vadd.f32 %v26, %v110
    %v112 = vpop.f32.mrb[0].mxu0
    %113 = vdwg.mxu0
    %v114 = vld [vmem:[%s1] sm:$0xff]
    %v115 = vld [vmem:[%s1 + $0x8] sm:$0xff]
    %v116 = vadd.f32 %v106, %v114
    %v117 = vadd.f32 %v111, %v115
    %vm118 = vcmask 261120
    %119 = vst.msk [vmem:[#allocation2] sm:$0xff] %vm118, %v116
    %120 = vst.msk [vmem:[#allocation2 + $0x8] sm:$0xff] %vm118, %v117
    // Predicated region
    $region18: #{tpu_custom_call.1} parent=1 // pred_check
      _
    $region19: #{tpu_custom_call.1} parent=1 // pred_check_branch
      %122 = sbr.rel (0) target = $region21
    $region20: #{tpu_custom_call.1} parent=1 // pred_region
      %s124 = ssub.s32 256, 256
      %125 = vsyncadd [#allocation3], %s124
      %s126 = sshll.u32 [#allocation2], 4
      %s127 = int_to_ptr.vmem [resolvable:$true] %s126
      %132 = dma.vmem_to_hbm [thread:$0]  %s127, 256, %s4, [#allocation3], 128, 128, 8
    $region21: #{tpu_custom_call.1} parent=1 // pred_fallthru
      _
    // Predicated region
    $region22: #{tpu_custom_call.1} parent=1 // pred_check
      _
    $region23: #{tpu_custom_call.1} parent=1 // pred_check_branch
      %134 = sbr.rel (0) target = $region25
    $region24: #{tpu_custom_call.1} parent=1 // pred_region
      %135 = dma.done [#allocation3], 256
    $region25: #{tpu_custom_call.1} parent=1 // pred_fallthru
      _
    %136 = vsyncpa [#allocation3], 1

</llo_original>
